<compile_context>
chip_gen: v7x
topology: tpu7x:2x2x1
jax: 0.10.0
libtpu: 0.0.40
codegen_flags: <defaults>
</compile_context>

<pallas_src>
import functools

import jax
import jax.numpy as jnp
from jax.experimental import pallas as pl
from jax.experimental.pallas import tpu as pltpu

NUM_CLASSES = 20
HIDDEN = (128, 64, 32)


def _round_up(x, m):
    return ((x + m - 1) // m) * m


def _mlp_kernel(x_ref,
                w1_ref, b1_ref,
                w2_ref, b2_ref,
                w3_ref, b3_ref,
                w4_ref, b4_ref,
                o_ref):
    # Cast the activation tile to bf16 in-kernel (x stays f32 in HBM; no extra
    # wrapper pass over the whole array).
    x = x_ref[...].astype(jnp.bfloat16)
    # Layer 1: Linear(d_in, 128) + ReLU. bf16 operands -> f32 accumulation.
    h = jnp.dot(x, w1_ref[...], preferred_element_type=jnp.float32)
    h = jnp.maximum(h + b1_ref[...], 0.0)
    # Layer 2: Linear(128, 64) + ReLU
    h = jnp.dot(h.astype(jnp.bfloat16), w2_ref[...],
                preferred_element_type=jnp.float32)
    h = jnp.maximum(h + b2_ref[...], 0.0)
    # Layer 3: Linear(64, 32) + ReLU
    h = jnp.dot(h.astype(jnp.bfloat16), w3_ref[...],
                preferred_element_type=jnp.float32)
    h = jnp.maximum(h + b3_ref[...], 0.0)
    # Layer 4: Linear(32, k) (no activation); block last dim == full array dim.
    h = jnp.dot(h.astype(jnp.bfloat16), w4_ref[...],
                preferred_element_type=jnp.float32)
    o_ref[...] = (h + b4_ref[...]).astype(o_ref.dtype)


def _tensorcores_per_chip():
    """Best-effort detection of TensorCores per chip (v7x has 2)."""
    try:
        kind = jax.devices()[0].device_kind.lower()
        if "v7" in kind:
            return 2
    except Exception:  # pragma: no cover - defensive
        pass
    return 1


def _choose_block_b(B, requested, d_in, k, num_cores):
    """Sublane-aligned (x16 for bf16) batch tile under a conservative VMEM budget."""
    B16 = _round_up(B, 16)
    bb = max(16, (min(requested, B16) // 16) * 16)

    # Keep double-buffered x (f32) + out (f32) comfortably under v5e's 16 MiB
    # default scoped VMEM (weights/intermediates are tiny by comparison).
    budget_bytes = 12 * 1024 * 1024
    per_row = (d_in * 4 + k * 4) * 2  # 2 pipeline buffers each
    max_rows = max(16, ((budget_bytes // per_row) // 16) * 16)
    bb = min(bb, max_rows)

    # Megacore (v7x only): prefer >= 2 sizeable grid steps, but never split a
    # small batch just to manufacture a second step (floor of 256 rows each).
    if num_cores >= 2:
        steps = pl.cdiv(B16, bb)
        if steps < 2 and B16 >= 512:
            bb = max(256, _round_up(pl.cdiv(B16, 2), 16))
    return bb


def prepare_params(params):
    """One-time weight prep: MXU operands in bf16, biases in f32 (epilogue)."""
    return [(w.astype(jnp.bfloat16), b.astype(jnp.float32)) for (w, b) in params]


@functools.partial(jax.jit, static_argnames=("block_b",))
def mlp_forward(x, params, block_b=1024):
    """x: (B, d_in) float32. params: prepared [(W bf16 (d_in_l, d_out_l), b f32 (1, d_out_l))]."""
    B, d_in = x.shape
    k = params[-1][0].shape[1]

    bb = _choose_block_b(B, block_b, d_in, k, _tensorcores_per_chip())
    grid = (pl.cdiv(B, bb),)  # ragged last block: no batch padding needed

    # Weights/biases: single full-extent blocks with constant index_maps
    # (grid-invariant -> fetched once, never re-DMA'd).
    weight_specs = []
    flat_params = []
    for (w, b) in params:
        weight_specs.append(pl.BlockSpec(w.shape, lambda i: (0, 0)))
        weight_specs.append(pl.BlockSpec(b.shape, lambda i: (0, 0)))
        flat_params.extend([w, b])

    dims = [d_in] + [w.shape[1] for (w, _) in params]
    flops = 2 * B * sum(a * b for a, b in zip(dims[:-1], dims[1:]))
    bytes_accessed = (B * d_in * 4 + B * k * 4
                      + sum(w.size * 2 + b.size * 4 for (w, b) in params))

    out = pl.pallas_call(
        _mlp_kernel,
        out_shape=jax.ShapeDtypeStruct((B, k), jnp.float32),
        grid_spec=pltpu.PrefetchScalarGridSpec(
            num_scalar_prefetch=0,
            grid=grid,
            in_specs=[pl.BlockSpec((bb, d_in), lambda i: (i, 0))]
            + weight_specs,
            out_specs=pl.BlockSpec((bb, k), lambda i: (i, 0)),
        ),
        compiler_params=pltpu.CompilerParams(
            dimension_semantics=("parallel",)),
        cost_estimate=pl.CostEstimate(flops=flops, transcendentals=0,
                                      bytes_accessed=bytes_accessed),
    )(x, *flat_params)

    return out


def init_params(key, d_in, k=NUM_CLASSES):
    """Deterministic init mimicking nn.Linear's U(-1/sqrt(fan_in), 1/sqrt(fan_in)).

    Weights stored transposed relative to PyTorch: (fan_in, fan_out)."""
    dims = (d_in,) + HIDDEN + (k,)
    params = []
    for fan_in, fan_out in zip(dims[:-1], dims[1:]):
        key, kw, kb = jax.random.split(key, 3)
        bound = 1.0 / jnp.sqrt(jnp.float32(fan_in))
        w = jax.random.uniform(kw, (fan_in, fan_out), jnp.float32,
                               minval=-bound, maxval=bound)
        b = jax.random.uniform(kb, (1, fan_out), jnp.float32,
                               minval=-bound, maxval=bound)
        params.append((w, b))
    return params


def mlp_reference(x, prepared_params):
    """Reference mirroring the kernel's bf16-operand / f32-accumulate math."""
    h = x
    for li, (w, b) in enumerate(prepared_params):
        h = jnp.dot(h.astype(jnp.bfloat16), w,
                    preferred_element_type=jnp.float32) + b
        if li < len(prepared_params) - 1:
            h = jnp.maximum(h, 0.0)
    return h


if __name__ == "__main__":
    key = jax.random.PRNGKey(0)
    kx, kp = jax.random.split(key)

    # Small demo; B deliberately NOT a multiple of the 16-row tile so the
    # ragged-last-block path is exercised (rows are independent, out-of-range
    # output rows are masked on writeback).
    B, D_IN = 10, 32
    x = jax.random.normal(kx, (B, D_IN), jnp.float32)
    params = prepare_params(init_params(kp, D_IN, NUM_CLASSES))

    out = mlp_forward(x, params)
    out = jax.block_until_ready(out)

    ref = mlp_reference(x, params)

    assert out.shape == (B, NUM_CLASSES), out.shape
    assert jnp.allclose(out, ref, atol=2e-2, rtol=2e-2), "mismatch vs reference"

    print("KERNEL_OK")
</pallas_src>

<mosaic_0001>
module attributes {stable_mosaic.version = 11 : i64} {
  func.func @_mlp_kernel(%arg0: i32, %arg1: memref<16x32xf32, #tpu.memory_space<vmem>>, %arg2: memref<32x128xbf16, #tpu.memory_space<vmem>>, %arg3: memref<1x128xf32, #tpu.memory_space<vmem>>, %arg4: memref<128x64xbf16, #tpu.memory_space<vmem>>, %arg5: memref<1x64xf32, #tpu.memory_space<vmem>>, %arg6: memref<64x32xbf16, #tpu.memory_space<vmem>>, %arg7: memref<1x32xf32, #tpu.memory_space<vmem>>, %arg8: memref<32x20xbf16, #tpu.memory_space<vmem>>, %arg9: memref<1x20xf32, #tpu.memory_space<vmem>>, %arg10: memref<16x20xf32, #tpu.memory_space<vmem>>) attributes {dimension_semantics = [#tpu.dimension_semantics<parallel>], iteration_bounds = array<i64: 1>, scalar_prefetch = 0 : i64, scratch_operands = 0 : i64, tpu.core_type = #tpu.core_type<tc>, window_params = [{transform_indices = @transform_0, window_bounds = array<i64: 16, 32>}, {pipeline_mode = #tpu.pipeline_mode<synchronous>, transform_indices = @transform_1, window_bounds = array<i64: 32, 128>}, {pipeline_mode = #tpu.pipeline_mode<synchronous>, transform_indices = @transform_2, window_bounds = array<i64: 1, 128>}, {pipeline_mode = #tpu.pipeline_mode<synchronous>, transform_indices = @transform_3, window_bounds = array<i64: 128, 64>}, {pipeline_mode = #tpu.pipeline_mode<synchronous>, transform_indices = @transform_4, window_bounds = array<i64: 1, 64>}, {pipeline_mode = #tpu.pipeline_mode<synchronous>, transform_indices = @transform_5, window_bounds = array<i64: 64, 32>}, {pipeline_mode = #tpu.pipeline_mode<synchronous>, transform_indices = @transform_6, window_bounds = array<i64: 1, 32>}, {pipeline_mode = #tpu.pipeline_mode<synchronous>, transform_indices = @transform_7, window_bounds = array<i64: 32, 20>}, {pipeline_mode = #tpu.pipeline_mode<synchronous>, transform_indices = @transform_8, window_bounds = array<i64: 1, 20>}, {transform_indices = @transform_9, window_bounds = array<i64: 16, 20>}]} {
    %c0 = arith.constant 0 : index
    %c0_0 = arith.constant 0 : index
    %0 = vector.load %arg1[%c0, %c0_0] : memref<16x32xf32, #tpu.memory_space<vmem>>, vector<16x32xf32>
    %1 = arith.truncf %0 : vector<16x32xf32> to vector<16x32xbf16>
    %c0_1 = arith.constant 0 : index
    %c0_2 = arith.constant 0 : index
    %2 = vector.load %arg2[%c0_1, %c0_2] : memref<32x128xbf16, #tpu.memory_space<vmem>>, vector<32x128xbf16>
    %cst = arith.constant dense<0.000000e+00> : vector<16x128xf32>
    %3 = tpu.matmul %1, %2, %cst {dimension_numbers = #tpu.dot_dimension_numbers<[1], [0], [0], [1], [0, 0, 1, 1], [], []>} : vector<16x32xbf16>, vector<32x128xbf16>, vector<16x128xf32> -> vector<16x128xf32>
    %c0_3 = arith.constant 0 : index
    %c0_4 = arith.constant 0 : index
    %4 = vector.load %arg3[%c0_3, %c0_4] : memref<1x128xf32, #tpu.memory_space<vmem>>, vector<1x128xf32>
    %5 = vector.broadcast %4 : vector<1x128xf32> to vector<16x128xf32>
    %6 = arith.addf %3, %5 : vector<16x128xf32>
    %cst_5 = arith.constant 0.000000e+00 : f32
    %7 = vector.broadcast %cst_5 : f32 to vector<16x128xf32>
    %8 = arith.maximumf %6, %7 : vector<16x128xf32>
    %9 = arith.truncf %8 : vector<16x128xf32> to vector<16x128xbf16>
    %c0_6 = arith.constant 0 : index
    %c0_7 = arith.constant 0 : index
    %10 = vector.load %arg4[%c0_6, %c0_7] : memref<128x64xbf16, #tpu.memory_space<vmem>>, vector<128x64xbf16>
    %cst_8 = arith.constant dense<0.000000e+00> : vector<16x64xf32>
    %11 = tpu.matmul %9, %10, %cst_8 {dimension_numbers = #tpu.dot_dimension_numbers<[1], [0], [0], [1], [0, 0, 1, 1], [], []>} : vector<16x128xbf16>, vector<128x64xbf16>, vector<16x64xf32> -> vector<16x64xf32>
    %c0_9 = arith.constant 0 : index
    %c0_10 = arith.constant 0 : index
    %12 = vector.load %arg5[%c0_9, %c0_10] : memref<1x64xf32, #tpu.memory_space<vmem>>, vector<1x64xf32>
    %13 = vector.broadcast %12 : vector<1x64xf32> to vector<16x64xf32>
    %14 = arith.addf %11, %13 : vector<16x64xf32>
    %cst_11 = arith.constant 0.000000e+00 : f32
    %15 = vector.broadcast %cst_11 : f32 to vector<16x64xf32>
    %16 = arith.maximumf %14, %15 : vector<16x64xf32>
    %17 = arith.truncf %16 : vector<16x64xf32> to vector<16x64xbf16>
    %c0_12 = arith.constant 0 : index
    %c0_13 = arith.constant 0 : index
    %18 = vector.load %arg6[%c0_12, %c0_13] : memref<64x32xbf16, #tpu.memory_space<vmem>>, vector<64x32xbf16>
    %cst_14 = arith.constant dense<0.000000e+00> : vector<16x32xf32>
    %19 = tpu.matmul %17, %18, %cst_14 {dimension_numbers = #tpu.dot_dimension_numbers<[1], [0], [0], [1], [0, 0, 1, 1], [], []>} : vector<16x64xbf16>, vector<64x32xbf16>, vector<16x32xf32> -> vector<16x32xf32>
    %c0_15 = arith.constant 0 : index
    %c0_16 = arith.constant 0 : index
    %20 = vector.load %arg7[%c0_15, %c0_16] : memref<1x32xf32, #tpu.memory_space<vmem>>, vector<1x32xf32>
    %21 = vector.broadcast %20 : vector<1x32xf32> to vector<16x32xf32>
    %22 = arith.addf %19, %21 : vector<16x32xf32>
    %cst_17 = arith.constant 0.000000e+00 : f32
    %23 = vector.broadcast %cst_17 : f32 to vector<16x32xf32>
    %24 = arith.maximumf %22, %23 : vector<16x32xf32>
    %25 = arith.truncf %24 : vector<16x32xf32> to vector<16x32xbf16>
    %c0_18 = arith.constant 0 : index
    %c0_19 = arith.constant 0 : index
    %26 = vector.load %arg8[%c0_18, %c0_19] : memref<32x20xbf16, #tpu.memory_space<vmem>>, vector<32x20xbf16>
    %cst_20 = arith.constant dense<0.000000e+00> : vector<16x20xf32>
    %27 = tpu.matmul %25, %26, %cst_20 {dimension_numbers = #tpu.dot_dimension_numbers<[1], [0], [0], [1], [0, 0, 1, 1], [], []>} : vector<16x32xbf16>, vector<32x20xbf16>, vector<16x20xf32> -> vector<16x20xf32>
    %c0_21 = arith.constant 0 : index
    %c0_22 = arith.constant 0 : index
    %28 = vector.load %arg9[%c0_21, %c0_22] : memref<1x20xf32, #tpu.memory_space<vmem>>, vector<1x20xf32>
    %29 = vector.broadcast %28 : vector<1x20xf32> to vector<16x20xf32>
    %30 = arith.addf %27, %29 : vector<16x20xf32>
    %c0_23 = arith.constant 0 : index
    %c0_24 = arith.constant 0 : index
    %31 = vector.load %arg10[%c0_23, %c0_24] : memref<16x20xf32, #tpu.memory_space<vmem>>, vector<16x20xf32>
    tpu.vector_store %arg10[%c0_23, %c0_24], %30 {strides = array<i32>} : memref<16x20xf32, #tpu.memory_space<vmem>>, vector<16x20xf32>,
    return
  }
  func.func @transform_0(%arg0: i32) -> (i32, i32) {
    %c0_i32 = arith.constant 0 : i32
    %c0_i32_0 = arith.constant 0 : i32
    return %arg0, %c0_i32 : i32, i32
  }
  func.func @transform_1(%arg0: i32) -> (i32, i32) {
    %c0_i32 = arith.constant 0 : i32
    %c0_i32_0 = arith.constant 0 : i32
    %c0_i32_1 = arith.constant 0 : i32
    return %c0_i32, %c0_i32_0 : i32, i32
  }
  func.func @transform_2(%arg0: i32) -> (i32, i32) {
    %c0_i32 = arith.constant 0 : i32
    %c0_i32_0 = arith.constant 0 : i32
    %c0_i32_1 = arith.constant 0 : i32
    return %c0_i32, %c0_i32_0 : i32, i32
  }
  func.func @transform_3(%arg0: i32) -> (i32, i32) {
    %c0_i32 = arith.constant 0 : i32
    %c0_i32_0 = arith.constant 0 : i32
    %c0_i32_1 = arith.constant 0 : i32
    return %c0_i32, %c0_i32_0 : i32, i32
  }
  func.func @transform_4(%arg0: i32) -> (i32, i32) {
    %c0_i32 = arith.constant 0 : i32
    %c0_i32_0 = arith.constant 0 : i32
    %c0_i32_1 = arith.constant 0 : i32
    return %c0_i32, %c0_i32_0 : i32, i32
  }
  func.func @transform_5(%arg0: i32) -> (i32, i32) {
    %c0_i32 = arith.constant 0 : i32
    %c0_i32_0 = arith.constant 0 : i32
    %c0_i32_1 = arith.constant 0 : i32
    return %c0_i32, %c0_i32_0 : i32, i32
  }
  func.func @transform_6(%arg0: i32) -> (i32, i32) {
    %c0_i32 = arith.constant 0 : i32
    %c0_i32_0 = arith.constant 0 : i32
    %c0_i32_1 = arith.constant 0 : i32
    return %c0_i32, %c0_i32_0 : i32, i32
  }
  func.func @transform_7(%arg0: i32) -> (i32, i32) {
    %c0_i32 = arith.constant 0 : i32
    %c0_i32_0 = arith.constant 0 : i32
    %c0_i32_1 = arith.constant 0 : i32
    return %c0_i32, %c0_i32_0 : i32, i32
  }
  func.func @transform_8(%arg0: i32) -> (i32, i32) {
    %c0_i32 = arith.constant 0 : i32
    %c0_i32_0 = arith.constant 0 : i32
    %c0_i32_1 = arith.constant 0 : i32
    return %c0_i32, %c0_i32_0 : i32, i32
  }
  func.func @transform_9(%arg0: i32) -> (i32, i32) {
    %c0_i32 = arith.constant 0 : i32
    %c0_i32_0 = arith.constant 0 : i32
    return %arg0, %c0_i32 : i32, i32
  }
}

</mosaic_0001>

<llo_original>
// kernel: mlp_forward.1
$region0: #{mlp_forward.1}
  #allocation0 [shape = 'u32[]', space=smem, size = 0x4, offset = 0x4, fixed_abs, tag = 'smem constant byte address 0x4 - core index']
  #allocation1 [shape = 'u32[144,128]{1,0:T(1,128)}', space=vmem, size = 0x12000, scoped, tag = 'internal scratch']
  %s0 = inlined_call_operand.vmem [shape: f32[10,32], index: 0, kind: input, shape index: {}]
  %s1 = inlined_call_operand.vmem [shape: bf16[32,128], index: 1, kind: input, shape index: {}]
  %s2 = inlined_call_operand.vmem [shape: f32[1,128], index: 2, kind: input, shape index: {}]
  %s3 = inlined_call_operand.vmem [shape: bf16[128,64], index: 3, kind: input, shape index: {}]
  %s4 = inlined_call_operand.vmem [shape: f32[1,64], index: 4, kind: input, shape index: {}]
  %s5 = inlined_call_operand.vmem [shape: bf16[64,32], index: 5, kind: input, shape index: {}]
  %s6 = inlined_call_operand.vmem [shape: f32[1,32], index: 6, kind: input, shape index: {}]
  %s7 = inlined_call_operand.vmem [shape: bf16[32,20], index: 7, kind: input, shape index: {}]
  %s8 = inlined_call_operand.vmem [shape: f32[1,20], index: 8, kind: input, shape index: {}]
  %s9 = inlined_call_operand.hbm [shape: f32[10,20], index: 9, kind: output, shape index: {}]
  %s10 = sld [smem:[#allocation0]]
  $region46: #{mlp_forward.1} parent=0
    _
  %s12 = ssub.s32 1, %s10
  %s13 = scalar_select 0, %s12, %s10
  $region1: #{mlp_forward.1} parent=0
    #allocation2 [shape = 'u8[8192]{0}', space=vmem, size = 0x2000, scoped, tag = 'output window, operand 0, single buffered']
    #allocation3 [shape = 's32[1]{0}', space=sflag, size = 0x4, scoped, tag = 'scoped memory for mlp_forward.1']
    %14 = vsyncpa [#allocation3], 0
    // Predicated region
    $region2: #{mlp_forward.1} parent=1 // pred_check
      _
    $region3: #{mlp_forward.1} parent=1 // pred_check_branch
      %16 = sbr.rel (0) target = $region5
    $region4: #{mlp_forward.1} parent=1 // pred_region
      _
    $region5: #{mlp_forward.1} parent=1 // pred_fallthru
      _
    // Predicated region
    $region6: #{mlp_forward.1} parent=1 // pred_check
      _
    $region7: #{mlp_forward.1} parent=1 // pred_check_branch
      %18 = sbr.rel (0) target = $region9
    $region8: #{mlp_forward.1} parent=1 // pred_region
      _
    $region9: #{mlp_forward.1} parent=1 // pred_fallthru
      _
    // Predicated region
    $region10: #{mlp_forward.1} parent=1 // pred_check
      _
    $region11: #{mlp_forward.1} parent=1 // pred_check_branch
      %20 = sbr.rel (0) target = $region13
    $region12: #{mlp_forward.1} parent=1 // pred_region
      _
    $region13: #{mlp_forward.1} parent=1 // pred_fallthru
      _
    // Predicated region
    $region14: #{mlp_forward.1} parent=1 // pred_check
      _
    $region15: #{mlp_forward.1} parent=1 // pred_check_branch
      %22 = sbr.rel (0) target = $region17
    $region16: #{mlp_forward.1} parent=1 // pred_region
      _
    $region17: #{mlp_forward.1} parent=1 // pred_fallthru
      _
    // Predicated region
    $region18: #{mlp_forward.1} parent=1 // pred_check
      _
    $region19: #{mlp_forward.1} parent=1 // pred_check_branch
      %24 = sbr.rel (0) target = $region21
    $region20: #{mlp_forward.1} parent=1 // pred_region
      _
    $region21: #{mlp_forward.1} parent=1 // pred_fallthru
      _
    // Predicated region
    $region22: #{mlp_forward.1} parent=1 // pred_check
      _
    $region23: #{mlp_forward.1} parent=1 // pred_check_branch
      %26 = sbr.rel (0) target = $region25
    $region24: #{mlp_forward.1} parent=1 // pred_region
      _
    $region25: #{mlp_forward.1} parent=1 // pred_fallthru
      _
    // Predicated region
    $region26: #{mlp_forward.1} parent=1 // pred_check
      _
    $region27: #{mlp_forward.1} parent=1 // pred_check_branch
      %28 = sbr.rel (0) target = $region29
    $region28: #{mlp_forward.1} parent=1 // pred_region
      _
    $region29: #{mlp_forward.1} parent=1 // pred_fallthru
      _
    // Predicated region
    $region30: #{mlp_forward.1} parent=1 // pred_check
      _
    $region31: #{mlp_forward.1} parent=1 // pred_check_branch
      %30 = sbr.rel (0) target = $region33
    $region32: #{mlp_forward.1} parent=1 // pred_region
      _
    $region33: #{mlp_forward.1} parent=1 // pred_fallthru
      _
    // Predicated region
    $region34: #{mlp_forward.1} parent=1 // pred_check
      _
    $region35: #{mlp_forward.1} parent=1 // pred_check_branch
      %32 = sbr.rel (0) target = $region37
    $region36: #{mlp_forward.1} parent=1 // pred_region
      _
    $region37: #{mlp_forward.1} parent=1 // pred_fallthru
      _
    %v34 = vld [vmem:[%s0] sm:$0xff]
    %v35 = vld [vmem:[%s0 + $0x8] sm:$0xff]
    %v36 = vpack.c.bf16 %v35, %v34
    %v37 = vld [vmem:[%s1] sm:$0xf]
    %v38 = vld [vmem:[%s1 + $0x4] sm:$0xf]
    %v39 = vld [vmem:[%s1 + $0x8] sm:$0xf]
    %v40 = vld [vmem:[%s1 + $0xc] sm:$0xf]
    %v41 = vld [vmem:[%s2] sm:$0x1]
    %v43 = vlaneseq
    %v44 = vshrl.u32 %v43, 7
    %v45 = vsub.s32 0, %v44
    %v46 = vrot.slane %v41, %v45
    %v52 = vunpack.c.l.b16 %v37
    %v53 = vunpack.c.l.b16 %v38
    %v54 = vunpack.c.l.b16 %v39
    %v55 = vunpack.c.l.b16 %v40
    %v56 = vpack.c.b16 %v53, %v52
    %v57 = vpack.c.b16 %v55, %v54
    %vm60 = vcmask 261120
    %v62 = vsel %vm60, %v36, 0
    %64 = vmatprep.subr.bf16.mxu0 0
    %65 = vmatpush1.bf16.msra.mxu0 %v56
    %66 = vmatprep.subr.bf16.mxu0 0
    %67 = vmatpush1.bf16.msra.mxu0 %v57
    %68 = vmatprep.subr.bf16.mxu0 0
    %69 = vmatpush1.bf16.msra.mxu0 0
    %70 = vmatprep.subr.bf16.mxu0 0
    %71 = vmatpush1.bf16.msra.mxu0 0
    %72 = vmatprep.subr.bf16.mxu0 0
    %73 = vmatpush1.bf16.msra.mxu0 0
    %74 = vmatprep.subr.bf16.mxu0 0
    %75 = vmatpush1.bf16.msra.mxu0 0
    %76 = vmatprep.subr.bf16.mxu0 0
    %77 = vmatpush1.bf16.msra.mxu0 0
    %78 = vmatprep.subr.bf16.mxu0 0
    %79 = vmatpush1.bf16.msra.mxu0 0
    %80 = vmatprep.subr.bf16.mxu0 0
    %81 = vmatpush1.bf16.msra.mxu0 0
    %82 = vmatprep.subr.bf16.mxu0 0
    %83 = vmatpush1.bf16.msra.mxu0 0
    %84 = vmatprep.subr.bf16.mxu0 0
    %85 = vmatpush1.bf16.msra.mxu0 0
    %86 = vmatprep.subr.bf16.mxu0 0
    %87 = vmatpush1.bf16.msra.mxu0 0
    %88 = vmatprep.subr.bf16.mxu0 0
    %89 = vmatpush1.bf16.msra.mxu0 0
    %90 = vmatprep.subr.bf16.mxu0 0
    %91 = vmatpush1.bf16.msra.mxu0 0
    %92 = vmatprep.subr.bf16.mxu0 0
    %93 = vmatpush1.bf16.msra.mxu0 0
    %94 = vmatprep.subr.bf16.mxu0 0
    %95 = vmatpush1.bf16.msra.mxu0 0
    %96 = vmatprep.mubr.bf16.mxu0 0
    %97 = vmatmul.mubr.bf16.gmra.mrb[0].mxu0 %v62
    %v98 = vpop.f32.mrb[0].mxu0
    %v99 = vadd.f32 %v46, %v98
    %v100 = vpop.f32.mrb[0].mxu0
    %v101 = vpop.f32.mrb[0].mxu0
    %v102 = vadd.f32 %v46, %v101
    %v103 = vpop.f32.mrb[0].mxu0
    %104 = vdwg.mxu0
    %v105 = vmax.f32 %v99, 0.0
    %v106 = vmax.f32 %v102, 0.0
    %v107 = vpack.c.bf16 %v106, %v105
    %v108 = vld [vmem:[%s3] sm:$0xf]
    %v109 = vld [vmem:[%s3 + $0x4] sm:$0xf]
    %v110 = vld [vmem:[%s3 + $0x8] sm:$0xf]
    %v111 = vld [vmem:[%s3 + $0xc] sm:$0xf]
    %v112 = vld [vmem:[%s3 + $0x10] sm:$0xf]
    %v113 = vld [vmem:[%s3 + $0x14] sm:$0xf]
    %v114 = vld [vmem:[%s3 + $0x18] sm:$0xf]
    %v115 = vld [vmem:[%s3 + $0x1c] sm:$0xf]
    %v116 = vld [vmem:[%s3 + $0x20] sm:$0xf]
    %v117 = vld [vmem:[%s3 + $0x24] sm:$0xf]
    %v118 = vld [vmem:[%s3 + $0x28] sm:$0xf]
    %v119 = vld [vmem:[%s3 + $0x2c] sm:$0xf]
    %v120 = vld [vmem:[%s3 + $0x30] sm:$0xf]
    %v121 = vld [vmem:[%s3 + $0x34] sm:$0xf]
    %v122 = vld [vmem:[%s3 + $0x38] sm:$0xf]
    %v123 = vld [vmem:[%s3 + $0x3c] sm:$0xf]
    %v124 = vld [vmem:[%s4] sm:$0x1]
    %v126 = vlaneseq
    %v127 = vshrl.u32 %v126, 7
    %v128 = vsub.s32 0, %v127
    %v129 = vrot.slane %v124, %v128
    %v147 = vunpack.c.l.b16 %v108
    %v148 = vunpack.c.l.b16 %v109
    %v149 = vunpack.c.l.b16 %v110
    %v150 = vunpack.c.l.b16 %v111
    %v151 = vunpack.c.l.b16 %v112
    %v152 = vunpack.c.l.b16 %v113
    %v153 = vunpack.c.l.b16 %v114
    %v154 = vunpack.c.l.b16 %v115
    %v155 = vunpack.c.l.b16 %v116
    %v156 = vunpack.c.l.b16 %v117
    %v157 = vunpack.c.l.b16 %v118
    %v158 = vunpack.c.l.b16 %v119
    %v159 = vunpack.c.l.b16 %v120
    %v160 = vunpack.c.l.b16 %v121
    %v161 = vunpack.c.l.b16 %v122
    %v162 = vunpack.c.l.b16 %v123
    %v163 = vpack.c.b16 %v148, %v147
    %v164 = vpack.c.b16 %v150, %v149
    %v165 = vpack.c.b16 %v152, %v151
    %v166 = vpack.c.b16 %v154, %v153
    %v167 = vpack.c.b16 %v156, %v155
    %v168 = vpack.c.b16 %v158, %v157
    %v169 = vpack.c.b16 %v160, %v159
    %v170 = vpack.c.b16 %v162, %v161
    %179 = vmatprep.subr.bf16.mxu0 0
    %180 = vmatpush1.bf16.msra.mxu0 %v163
    %181 = vmatprep.subr.bf16.mxu0 0
    %182 = vmatpush1.bf16.msra.mxu0 %v164
    %183 = vmatprep.subr.bf16.mxu0 0
    %184 = vmatpush1.bf16.msra.mxu0 %v165
    %185 = vmatprep.subr.bf16.mxu0 0
    %186 = vmatpush1.bf16.msra.mxu0 %v166
    %187 = vmatprep.subr.bf16.mxu0 0
    %188 = vmatpush1.bf16.msra.mxu0 %v167
    %189 = vmatprep.subr.bf16.mxu0 0
    %190 = vmatpush1.bf16.msra.mxu0 %v168
    %191 = vmatprep.subr.bf16.mxu0 0
    %192 = vmatpush1.bf16.msra.mxu0 %v169
    %193 = vmatprep.subr.bf16.mxu0 0
    %194 = vmatpush1.bf16.msra.mxu0 %v170
    %195 = vmatprep.subr.bf16.mxu0 0
    %196 = vmatpush1.bf16.msra.mxu0 0
    %197 = vmatprep.subr.bf16.mxu0 0
    %198 = vmatpush1.bf16.msra.mxu0 0
    %199 = vmatprep.subr.bf16.mxu0 0
    %200 = vmatpush1.bf16.msra.mxu0 0
    %201 = vmatprep.subr.bf16.mxu0 0
    %202 = vmatpush1.bf16.msra.mxu0 0
    %203 = vmatprep.subr.bf16.mxu0 0
    %204 = vmatpush1.bf16.msra.mxu0 0
    %205 = vmatprep.subr.bf16.mxu0 0
    %206 = vmatpush1.bf16.msra.mxu0 0
    %207 = vmatprep.subr.bf16.mxu0 0
    %208 = vmatpush1.bf16.msra.mxu0 0
    %209 = vmatprep.subr.bf16.mxu0 0
    %210 = vmatpush1.bf16.msra.mxu0 0
    %211 = vmatprep.mubr.bf16.mxu0 0
    %212 = vmatmul.mubr.bf16.gmra.mrb[0].mxu0 %v107
    %v213 = vpop.f32.mrb[0].mxu0
    %v214 = vadd.f32 %v129, %v213
    %v215 = vpop.f32.mrb[0].mxu0
    %v216 = vpop.f32.mrb[0].mxu0
    %v217 = vadd.f32 %v129, %v216
    %v218 = vpop.f32.mrb[0].mxu0
    %219 = vdwg.mxu0
    %v220 = vmax.f32 %v214, 0.0
    %v221 = vmax.f32 %v217, 0.0
    %v222 = vpack.c.bf16 %v221, %v220
    %v223 = vld [vmem:[%s5] sm:$0xf]
    %v224 = vld [vmem:[%s5 + $0x4] sm:$0xf]
    %v225 = vld [vmem:[%s5 + $0x8] sm:$0xf]
    %v226 = vld [vmem:[%s5 + $0xc] sm:$0xf]
    %v227 = vld [vmem:[%s5 + $0x10] sm:$0xf]
    %v228 = vld [vmem:[%s5 + $0x14] sm:$0xf]
    %v229 = vld [vmem:[%s5 + $0x18] sm:$0xf]
    %v230 = vld [vmem:[%s5 + $0x1c] sm:$0xf]
    %v231 = vld [vmem:[%s6] sm:$0x1]
    %v233 = vlaneseq
    %v234 = vshrl.u32 %v233, 7
    %v235 = vsub.s32 0, %v234
    %v236 = vrot.slane %v231, %v235
    %v246 = vunpack.c.l.b16 %v223
    %v247 = vunpack.c.l.b16 %v224
    %v248 = vunpack.c.l.b16 %v225
    %v249 = vunpack.c.l.b16 %v226
    %v250 = vunpack.c.l.b16 %v227
    %v251 = vunpack.c.l.b16 %v228
    %v252 = vunpack.c.l.b16 %v229
    %v253 = vunpack.c.l.b16 %v230
    %v254 = vpack.c.b16 %v247, %v246
    %v255 = vpack.c.b16 %v249, %v248
    %v256 = vpack.c.b16 %v251, %v250
    %v257 = vpack.c.b16 %v253, %v252
    %vm262 = vcmask 523264
    %v264 = vsel %vm262, %v222, 0
    %266 = vmatprep.subr.bf16.mxu0 0
    %267 = vmatpush1.bf16.msra.mxu0 %v254
    %268 = vmatprep.subr.bf16.mxu0 0
    %269 = vmatpush1.bf16.msra.mxu0 %v255
    %270 = vmatprep.subr.bf16.mxu0 0
    %271 = vmatpush1.bf16.msra.mxu0 %v256
    %272 = vmatprep.subr.bf16.mxu0 0
    %273 = vmatpush1.bf16.msra.mxu0 %v257
    %274 = vmatprep.subr.bf16.mxu0 0
    %275 = vmatpush1.bf16.msra.mxu0 0
    %276 = vmatprep.subr.bf16.mxu0 0
    %277 = vmatpush1.bf16.msra.mxu0 0
    %278 = vmatprep.subr.bf16.mxu0 0
    %279 = vmatpush1.bf16.msra.mxu0 0
    %280 = vmatprep.subr.bf16.mxu0 0
    %281 = vmatpush1.bf16.msra.mxu0 0
    %282 = vmatprep.subr.bf16.mxu0 0
    %283 = vmatpush1.bf16.msra.mxu0 0
    %284 = vmatprep.subr.bf16.mxu0 0
    %285 = vmatpush1.bf16.msra.mxu0 0
    %286 = vmatprep.subr.bf16.mxu0 0
    %287 = vmatpush1.bf16.msra.mxu0 0
    %288 = vmatprep.subr.bf16.mxu0 0
    %289 = vmatpush1.bf16.msra.mxu0 0
    %290 = vmatprep.subr.bf16.mxu0 0
    %291 = vmatpush1.bf16.msra.mxu0 0
    %292 = vmatprep.subr.bf16.mxu0 0
    %293 = vmatpush1.bf16.msra.mxu0 0
    %294 = vmatprep.subr.bf16.mxu0 0
    %295 = vmatpush1.bf16.msra.mxu0 0
    %296 = vmatprep.subr.bf16.mxu0 0
    %297 = vmatpush1.bf16.msra.mxu0 0
    %298 = vmatprep.mubr.bf16.mxu0 0
    %299 = vmatmul.mubr.bf16.gmra.mrb[0].mxu0 %v264
    %v300 = vpop.f32.mrb[0].mxu0
    %v301 = vadd.f32 %v236, %v300
    %v302 = vpop.f32.mrb[0].mxu0
    %v303 = vpop.f32.mrb[0].mxu0
    %v304 = vadd.f32 %v236, %v303
    %v305 = vpop.f32.mrb[0].mxu0
    %306 = vdwg.mxu0
    %v307 = vmax.f32 %v301, 0.0
    %v308 = vmax.f32 %v304, 0.0
    %v309 = vpack.c.bf16 %v308, %v307
    %v310 = vld [vmem:[%s7] sm:$0xf]
    %v311 = vld [vmem:[%s7 + $0x4] sm:$0xf]
    %v312 = vld [vmem:[%s7 + $0x8] sm:$0xf]
    %v313 = vld [vmem:[%s7 + $0xc] sm:$0xf]
    %v314 = vld [vmem:[%s8] sm:$0x1]
    %v316 = vlaneseq
    %v317 = vshrl.u32 %v316, 7
    %v318 = vsub.s32 0, %v317
    %v319 = vrot.slane %v314, %v318
    %v325 = vunpack.c.l.b16 %v310
    %v326 = vunpack.c.l.b16 %v311
    %v327 = vunpack.c.l.b16 %v312
    %v328 = vunpack.c.l.b16 %v313
    %v329 = vpack.c.b16 %v326, %v325
    %v330 = vpack.c.b16 %v328, %v327
    %v334 = vsel %vm60, %v309, 0
    %336 = vmatprep.subr.bf16.mxu0 0
    %337 = vmatpush1.bf16.msra.mxu0 %v329
    %338 = vmatprep.subr.bf16.mxu0 0
    %339 = vmatpush1.bf16.msra.mxu0 %v330
    %340 = vmatprep.subr.bf16.mxu0 0
    %341 = vmatpush1.bf16.msra.mxu0 0
    %342 = vmatprep.subr.bf16.mxu0 0
    %343 = vmatpush1.bf16.msra.mxu0 0
    %344 = vmatprep.subr.bf16.mxu0 0
    %345 = vmatpush1.bf16.msra.mxu0 0
    %346 = vmatprep.subr.bf16.mxu0 0
    %347 = vmatpush1.bf16.msra.mxu0 0
    %348 = vmatprep.subr.bf16.mxu0 0
    %349 = vmatpush1.bf16.msra.mxu0 0
    %350 = vmatprep.subr.bf16.mxu0 0
    %351 = vmatpush1.bf16.msra.mxu0 0
    %352 = vmatprep.subr.bf16.mxu0 0
    %353 = vmatpush1.bf16.msra.mxu0 0
    %354 = vmatprep.subr.bf16.mxu0 0
    %355 = vmatpush1.bf16.msra.mxu0 0
    %356 = vmatprep.subr.bf16.mxu0 0
    %357 = vmatpush1.bf16.msra.mxu0 0
    %358 = vmatprep.subr.bf16.mxu0 0
    %359 = vmatpush1.bf16.msra.mxu0 0
    %360 = vmatprep.subr.bf16.mxu0 0
    %361 = vmatpush1.bf16.msra.mxu0 0
    %362 = vmatprep.subr.bf16.mxu0 0
    %363 = vmatpush1.bf16.msra.mxu0 0
    %364 = vmatprep.subr.bf16.mxu0 0
    %365 = vmatpush1.bf16.msra.mxu0 0
    %366 = vmatprep.subr.bf16.mxu0 0
    %367 = vmatpush1.bf16.msra.mxu0 0
    %368 = vmatprep.mubr.bf16.mxu0 0
    %369 = vmatmul.mubr.bf16.gmra.mrb[0].mxu0 %v334
    %v370 = vpop.f32.mrb[0].mxu0
    %v371 = vadd.f32 %v319, %v370
    %v372 = vpop.f32.mrb[0].mxu0
    %v373 = vpop.f32.mrb[0].mxu0
    %v374 = vadd.f32 %v319, %v373
    %v375 = vpop.f32.mrb[0].mxu0
    %376 = vdwg.mxu0
    %vm377 = vcmask 162816
    %378 = vst.msk [vmem:[#allocation2] sm:$0xff] %vm377, %v371
    %379 = vst.msk [vmem:[#allocation2 + $0x8] sm:$0xff] %vm377, %v374
    // Predicated region
    $region38: #{mlp_forward.1} parent=1 // pred_check
      _
    $region39: #{mlp_forward.1} parent=1 // pred_check_branch
      %381 = sbr.rel (0) target = $region41
    $region40: #{mlp_forward.1} parent=1 // pred_region
      %s383 = ssub.s32 256, 256
      %384 = vsyncadd [#allocation3], %s383
      %s385 = sshll.u32 [#allocation2], 4
      %s386 = int_to_ptr.vmem [resolvable:$true] %s385
      %391 = dma.vmem_to_hbm [thread:$0]  %s386, 256, %s9, [#allocation3], 128, 128, 8
    $region41: #{mlp_forward.1} parent=1 // pred_fallthru
      _
    // Predicated region
    $region42: #{mlp_forward.1} parent=1 // pred_check
      _
    $region43: #{mlp_forward.1} parent=1 // pred_check_branch
      %393 = sbr.rel (0) target = $region45
    $region44: #{mlp_forward.1} parent=1 // pred_region
      %394 = dma.done [#allocation3], 256
    $region45: #{mlp_forward.1} parent=1 // pred_fallthru
      _
    %395 = vsyncpa [#allocation3], 1

</llo_original>
